<compile_context>
chip_gen: v7x
topology: tpu7x:2x2x1
jax: 0.10.0
libtpu: 0.0.40
codegen_flags: <defaults>
</compile_context>

<pallas_src>
import functools
import math

import jax
import jax.numpy as jnp
from jax.experimental import pallas as pl
from jax.experimental.pallas import tpu as pltpu


def _label_smoothing_kernel(x_ref, tgt_ref, out_ref, *,
                            n_rows, tile_n, padding_idx,
                            confidence, smooth_val, row_const):
    """One row-block: per-row corrections on top of a plain HBM stream of x."""
    i = pl.program_id(0)

    x = x_ref[...].astype(jnp.float32)        # (tn, V) log-probabilities
    tgt = tgt_ref[...]                        # (tn, 1) int32 class indices
    tn, v = x.shape

    col = jax.lax.broadcasted_iota(jnp.int32, (tn, v), 1)

    # Full-tile work: one plain row-sum and one masked row-sum (compare +
    # select feed the XLU reduction); the padding column is a static lane
    # slice, not another masked pass.
    s_row = jnp.sum(x, axis=-1, keepdims=True)                         # (tn,1)
    x_tgt = jnp.sum(jnp.where(col == tgt, x, jnp.float32(0.0)),
                    axis=-1, keepdims=True)                            # (tn,1)
    x_pad = x[:, padding_idx:padding_idx + 1]                          # (tn,1)

    # Per-row algebra (all (tn, 1); negligible next to the HBM stream):
    per_row = (jnp.float32(row_const)
               - jnp.float32(smooth_val) * (s_row - x_pad - x_tgt)
               - jnp.float32(confidence) * x_tgt)

    # Row validity: rows whose target is the padding index are zeroed
    # (index_fill_), and rows past the real N in the (possibly overhanging)
    # last block are masked.  Applied per-row only.
    row = i * tile_n + jax.lax.broadcasted_iota(jnp.int32, (tn, 1), 0)
    row_ok = jnp.logical_and(tgt != padding_idx, row < n_rows)
    per_row = jnp.where(row_ok, per_row, jnp.float32(0.0))

    out_ref[...] = jnp.broadcast_to(jnp.sum(per_row), out_ref.shape)


def _vmem_budget():
    """Generation-aware (x_buffer_bytes, vmem_limit_bytes)."""
    mib = 1024 * 1024
    cap = None
    try:
        info = pltpu.get_tpu_info()
        cap = getattr(info, "vmem_capacity_bytes", None)
    except Exception:
        cap = None
    if cap is None:
        return 8 * mib, 48 * mib          # unknown chip: conservative
    if cap >= 100 * mib:                  # v5e / v6e (128 MiB physical VMEM)
        return 16 * mib, 72 * mib
    if cap >= 60 * mib:                   # v7x-class (64 MiB physical VMEM)
        return 12 * mib, 52 * mib
    return 8 * mib, 40 * mib


def _choose_tile_n(n, v, itemsize, bytes_per_buffer):
    """Largest sublane-friendly row tile fitting the per-buffer VMEM budget.

    Per-row footprint: the x row plus the lane-padded (tile_n, 1) int32 target
    block (~512 B/row in VMEM once padded to the (8, 128) tile)."""
    per_row = v * itemsize + 512
    rows = int(bytes_per_buffer // max(per_row, 1))
    rows -= rows % 16          # sublane-friendly for both f32 and bf16 inputs
    rows = max(rows, 16)
    if rows >= n:
        return n               # single block covering the full row dimension
    return rows


def label_smoothing_loss(x, target, *, size, padding_idx, smoothing,
                         tile_n=None, vmem_limit_bytes=None):
    """Forward pass of LabelSmoothing as a Pallas TPU kernel.

    x:      (N, size) float32/bfloat16 log-probabilities
    target: (N,)      int class indices
    returns scalar float32 loss (sum reduction).
    """
    n, v = x.shape
    assert v == size, "x.shape[1] must equal `size`"

    buffer_bytes, default_limit = _vmem_budget()
    if vmem_limit_bytes is None:
        vmem_limit_bytes = default_limit
    if tile_n is None:
        tile_n = _choose_tile_n(n, v, x.dtype.itemsize, buffer_bytes)
    num_blocks = pl.cdiv(n, tile_n)

    confidence = 1.0 - smoothing
    smooth_val = smoothing / (size - 2)
    # Guard log(0): when a branch's probability is 0 its contribution is 0
    # anyway (coefficient is 0), so the constant's value is irrelevant.
    log_conf = math.log(confidence) if confidence > 0.0 else 0.0
    log_smooth = math.log(smooth_val) if smooth_val > 0.0 else 0.0
    row_const = confidence * log_conf + (size - 2) * smooth_val * log_smooth

    tgt2d = target.reshape(n, 1).astype(jnp.int32)
    # TODO(synk): moving targets to SMEM via scalar prefetch would drop the
    # lane-padded (tile_n, 1) VMEM block entirely (~1-2% for small vocab).

    kernel = functools.partial(
        _label_smoothing_kernel,
        n_rows=n, tile_n=tile_n, padding_idx=padding_idx,
        confidence=confidence, smooth_val=smooth_val, row_const=row_const)

    partials = pl.pallas_call(
        kernel,
        out_shape=jax.ShapeDtypeStruct((num_blocks, 8, 128), jnp.float32),
        grid_spec=pltpu.PrefetchScalarGridSpec(
            num_scalar_prefetch=0,
            grid=(num_blocks,),
            in_specs=[
                pl.BlockSpec((tile_n, v), lambda i: (i, 0)),
                pl.BlockSpec((tile_n, 1), lambda i: (i, 0)),
            ],
            out_specs=pl.BlockSpec((1, 8, 128), lambda i: (i, 0, 0)),
        ),
        compiler_params=pltpu.CompilerParams(
            dimension_semantics=("parallel",),
            vmem_limit_bytes=vmem_limit_bytes),
        # TODO(synk): on v7x, consider pltpu.CORE_PARALLEL on the row-block
        # axis (or pl.core_map over a 2-TC mesh) if xprof shows only one
        # TensorCore streaming; plain "parallel" is kept here for portability.
    )(x, tgt2d)

    return jnp.sum(partials[:, 0, 0])


def _reference_loss(x, target, *, size, padding_idx, smoothing):
    """Plain-JAX reference mirroring the PyTorch module."""
    n, v = x.shape
    confidence = 1.0 - smoothing
    td = jnp.full((n, v), smoothing / (size - 2), dtype=jnp.float32)
    td = td.at[jnp.arange(n), target].set(confidence)
    td = td.at[:, padding_idx].set(0.0)
    td = jnp.where((target == padding_idx)[:, None], 0.0, td)
    pointwise = jnp.where(td > 0, td * (jnp.log(td) - x.astype(jnp.float32)), 0.0)
    return jnp.sum(pointwise)


if __name__ == "__main__":
    # Case 1: small config consistent with the module's forward assumptions.
    SIZE = 32           # vocab size (x.size(1))
    PADDING_IDX = 0
    SMOOTHING = 0.1
    N = 16              # number of tokens (rows)

    key = jax.random.PRNGKey(0)
    kx, kt = jax.random.split(key)

    # x must be log-probabilities for KLDivLoss semantics.
    logits = jax.random.normal(kx, (N, SIZE), dtype=jnp.float32)
    x = jax.nn.log_softmax(logits, axis=-1)

    target = jax.random.randint(kt, (N,), 0, SIZE, dtype=jnp.int32)
    # Force a couple of padding targets so the row-masking path is exercised.
    target = target.at[3].set(PADDING_IDX).at[10].set(PADDING_IDX)

    loss = label_smoothing_loss(
        x, target, size=SIZE, padding_idx=PADDING_IDX, smoothing=SMOOTHING)
    loss = jax.block_until_ready(loss)

    ref = _reference_loss(
        x, target, size=SIZE, padding_idx=PADDING_IDX, smoothing=SMOOTHING)
    assert jnp.allclose(loss, ref, rtol=1e-5, atol=1e-4), (loss, ref)

    # Case 2: multi-block grid with a ragged tail (N not divisible by tile_n)
    # to exercise the in-kernel row masking and the per-block partial sums.
    SIZE2, N2 = 160, 50
    k2x, k2t = jax.random.split(jax.random.PRNGKey(1))
    x2 = jax.nn.log_softmax(
        jax.random.normal(k2x, (N2, SIZE2), dtype=jnp.float32), axis=-1)
    t2 = jax.random.randint(k2t, (N2,), 0, SIZE2, dtype=jnp.int32)
    t2 = t2.at[0].set(PADDING_IDX).at[17].set(PADDING_IDX)

    loss2 = label_smoothing_loss(
        x2, t2, size=SIZE2, padding_idx=PADDING_IDX, smoothing=SMOOTHING,
        tile_n=16)
    loss2 = jax.block_until_ready(loss2)
    ref2 = _reference_loss(
        x2, t2, size=SIZE2, padding_idx=PADDING_IDX, smoothing=SMOOTHING)
    assert jnp.allclose(loss2, ref2, rtol=1e-5, atol=1e-4), (loss2, ref2)

    print("KERNEL_OK")
</pallas_src>

<mosaic_0001>
module attributes {stable_mosaic.version = 11 : i64} {
  func.func @_label_smoothing_kernel(%arg0: i32, %arg1: memref<16x32xf32, #tpu.memory_space<vmem>>, %arg2: memref<16x1xi32, #tpu.memory_space<vmem>>, %arg3: memref<1x8x128xf32, #tpu.memory_space<vmem>>) attributes {dimension_semantics = [#tpu.dimension_semantics<parallel>], iteration_bounds = array<i64: 1>, scalar_prefetch = 0 : i64, scratch_operands = 0 : i64, tpu.core_type = #tpu.core_type<tc>, window_params = [{transform_indices = @transform_0, window_bounds = array<i64: 16, 32>}, {transform_indices = @transform_1, window_bounds = array<i64: 16, 1>}, {transform_indices = @transform_2, window_bounds = array<i64: 1, 8, 128>}]} {
    %c0 = arith.constant 0 : index
    %c0_0 = arith.constant 0 : index
    %0 = vector.load %arg1[%c0, %c0_0] : memref<16x32xf32, #tpu.memory_space<vmem>>, vector<16x32xf32>
    %c0_1 = arith.constant 0 : index
    %c0_2 = arith.constant 0 : index
    %1 = vector.load %arg2[%c0_1, %c0_2] : memref<16x1xi32, #tpu.memory_space<vmem>>, vector<16x1xi32>
    %2 = tpu.iota {dimensions = array<i32: 1>} : vector<16x32xi32>
    %cst = arith.constant dense<0.000000e+00> : vector<16xf32>
    %3 = vector.multi_reduction <add>, %0, %cst [1] : vector<16x32xf32> to vector<16xf32>
    %4 = vector.shape_cast %3 : vector<16xf32> to vector<16x1xf32>
    %5 = vector.broadcast %1 : vector<16x1xi32> to vector<16x32xi32>
    %6 = arith.cmpi eq, %2, %5 : vector<16x32xi32>
    %cst_3 = arith.constant 0.000000e+00 : f32
    %7 = vector.broadcast %cst_3 : f32 to vector<16x32xf32>
    %8 = arith.select %6, %0, %7 : vector<16x32xi1>, vector<16x32xf32>
    %cst_4 = arith.constant dense<0.000000e+00> : vector<16xf32>
    %9 = vector.multi_reduction <add>, %8, %cst_4 [1] : vector<16x32xf32> to vector<16xf32>
    %10 = vector.shape_cast %9 : vector<16xf32> to vector<16x1xf32>
    %11 = vector.extract_strided_slice %0 {offsets = [0, 0], sizes = [16, 1], strides = [1, 1]} : vector<16x32xf32> to vector<16x1xf32>
    %12 = arith.subf %4, %11 : vector<16x1xf32>
    %13 = arith.subf %12, %10 : vector<16x1xf32>
    %cst_5 = arith.constant 0.00333333341 : f32
    %14 = vector.broadcast %cst_5 : f32 to vector<16x1xf32>
    %15 = arith.mulf %14, %13 : vector<16x1xf32>
    %cst_6 = arith.constant -0.665202737 : f32
    %16 = vector.broadcast %cst_6 : f32 to vector<16x1xf32>
    %17 = arith.subf %16, %15 : vector<16x1xf32>
    %cst_7 = arith.constant 0.899999976 : f32
    %18 = vector.broadcast %cst_7 : f32 to vector<16x1xf32>
    %19 = arith.mulf %18, %10 : vector<16x1xf32>
    %20 = arith.subf %17, %19 : vector<16x1xf32>
    %c16_i32 = arith.constant 16 : i32
    %21 = arith.muli %arg0, %c16_i32 : i32
    %22 = tpu.iota {dimensions = array<i32: 0>} : vector<16x1xi32>
    %23 = vector.broadcast %21 : i32 to vector<16x1xi32>
    %24 = arith.addi %23, %22 : vector<16x1xi32>
    %c0_i32 = arith.constant 0 : i32
    %25 = vector.broadcast %c0_i32 : i32 to vector<16x1xi32>
    %26 = arith.cmpi ne, %1, %25 : vector<16x1xi32>
    %c16_i32_8 = arith.constant 16 : i32
    %27 = vector.broadcast %c16_i32_8 : i32 to vector<16x1xi32>
    %28 = arith.cmpi slt, %24, %27 : vector<16x1xi32>
    %29 = arith.andi %26, %28 : vector<16x1xi1>
    %cst_9 = arith.constant 0.000000e+00 : f32
    %30 = vector.broadcast %cst_9 : f32 to vector<16x1xf32>
    %31 = arith.select %29, %20, %30 : vector<16x1xi1>, vector<16x1xf32>
    %32 = vector.shape_cast %31 : vector<16x1xf32> to vector<1x16x1xf32>
    %cst_10 = arith.constant dense<0.000000e+00> : vector<1xf32>
    %33 = vector.multi_reduction <add>, %32, %cst_10 [1, 2] : vector<1x16x1xf32> to vector<1xf32>
    %34 = vector.shape_cast %33 : vector<1xf32> to vector<1x1x1xf32>
    %35 = vector.extract %34[0, 0, 0] : f32 from vector<1x1x1xf32>
    %36 = vector.broadcast %35 : f32 to vector<1x8x128xf32>
    %c0_11 = arith.constant 0 : index
    %c0_12 = arith.constant 0 : index
    %c0_13 = arith.constant 0 : index
    %37 = vector.load %arg3[%c0_11, %c0_12, %c0_13] : memref<1x8x128xf32, #tpu.memory_space<vmem>>, vector<1x8x128xf32>
    tpu.vector_store %arg3[%c0_11, %c0_12, %c0_13], %36 {strides = array<i32>} : memref<1x8x128xf32, #tpu.memory_space<vmem>>, vector<1x8x128xf32>,
    return
  }
  func.func @transform_0(%arg0: i32) -> (i32, i32) {
    %c0_i32 = arith.constant 0 : i32
    %c0_i32_0 = arith.constant 0 : i32
    return %arg0, %c0_i32 : i32, i32
  }
  func.func @transform_1(%arg0: i32) -> (i32, i32) {
    %c0_i32 = arith.constant 0 : i32
    %c0_i32_0 = arith.constant 0 : i32
    return %arg0, %c0_i32 : i32, i32
  }
  func.func @transform_2(%arg0: i32) -> (i32, i32, i32) {
    %c0_i32 = arith.constant 0 : i32
    %c0_i32_0 = arith.constant 0 : i32
    %c0_i32_1 = arith.constant 0 : i32
    return %arg0, %c0_i32, %c0_i32_0 : i32, i32, i32
  }
}

</mosaic_0001>

<llo_original>
// kernel: tpu_custom_call.1
$region0: #{tpu_custom_call.1}
  #allocation0 [shape = 'u32[]', space=smem, size = 0x4, offset = 0x4, fixed_abs, tag = 'smem constant byte address 0x4 - core index']
  #allocation1 [shape = 'u32[144,128]{1,0:T(1,128)}', space=vmem, size = 0x12000, scoped, tag = 'internal scratch']
  %s0 = inlined_call_operand.vmem [shape: f32[16,32], index: 0, kind: input, shape index: {}]
  %s1 = inlined_call_operand.vmem [shape: s32[16,1], index: 1, kind: input, shape index: {}]
  %s2 = inlined_call_operand.hbm [shape: f32[1,8,128], index: 2, kind: output, shape index: {}]
  %s3 = sld [smem:[#allocation0]]
  $region18: #{tpu_custom_call.1} parent=0
    _
  %s5 = ssub.s32 1, %s3
  %s6 = scalar_select 0, %s5, %s3
  $region1: #{tpu_custom_call.1} parent=0
    #allocation2 [shape = 'u8[4096]{0}', space=vmem, size = 0x1000, scoped, tag = 'output window, operand 0, single buffered']
    #allocation3 [shape = 's32[1]{0}', space=sflag, size = 0x4, scoped, tag = 'scoped memory for tpu_custom_call.1']
    %7 = vsyncpa [#allocation3], 0
    // Predicated region
    $region2: #{tpu_custom_call.1} parent=1 // pred_check
      _
    $region3: #{tpu_custom_call.1} parent=1 // pred_check_branch
      %9 = sbr.rel (0) target = $region5
    $region4: #{tpu_custom_call.1} parent=1 // pred_region
      _
    $region5: #{tpu_custom_call.1} parent=1 // pred_fallthru
      _
    // Predicated region
    $region6: #{tpu_custom_call.1} parent=1 // pred_check
      _
    $region7: #{tpu_custom_call.1} parent=1 // pred_check_branch
      %11 = sbr.rel (0) target = $region9
    $region8: #{tpu_custom_call.1} parent=1 // pred_region
      _
    $region9: #{tpu_custom_call.1} parent=1 // pred_fallthru
      _
    %v12 = vld [vmem:[%s0] sm:$0xff]
    %v13 = vld [vmem:[%s0 + $0x8] sm:$0xff]
    %v14 = vld [vmem:[%s1] sm:$0xff]
    %v15 = vld [vmem:[%s1 + $0x8] sm:$0xff]
    %v16 = vlaneseq
    %v17 = vand.u32 %v16, 127
    %vm18 = vcmask 261120
    %v19 = vsel %vm18, %v12, 0.0
    %20 = vadd.xlane.f32.xlu0 %v19
    %v21 = vpop.xlane.xlu0 %20
    %v22 = vsel %vm18, %v13, 0.0
    %23 = vadd.xlane.f32.xlu0 %v22
    %v24 = vpop.xlane.xlu0 %23
    %25 = vset.pattern.permute.xlu0 0
    %26 = vperm.xlu0 %25, %v14
    %v27 = vpop.permute.xlu0 %26
    %28 = vset.pattern.permute.xlu0 0
    %29 = vperm.xlu0 %28, %v15
    %v30 = vpop.permute.xlu0 %29
    %vm31 = vcmp.eq.s32.totalorder %v17, %v27
    %vm32 = vcmp.eq.s32.totalorder %v17, %v30
    %v33 = vsel %vm31, %v12, 0.0
    %v34 = vsel %vm32, %v13, 0.0
    %v35 = vsel %vm18, %v33, 0.0
    %36 = vadd.xlane.f32.xlu0 %v35
    %v37 = vpop.xlane.xlu0 %36
    %v38 = vsel %vm18, %v34, 0.0
    %39 = vadd.xlane.f32.xlu0 %v38
    %v40 = vpop.xlane.xlu0 %39
    %v41 = vsub.f32 %v21, %v12
    %v42 = vsub.f32 %v24, %v13
    %v43 = vsub.f32 %v41, %v37
    %v44 = vsub.f32 %v42, %v40
    %v45 = vmul.f32 %v43, 0.0033333334
    %v46 = vmul.f32 %v44, 0.0033333334
    %v47 = vsub.f32 -0.66520274, %v45
    %v48 = vsub.f32 -0.66520274, %v46
    %v49 = vmul.f32 %v37, 0.9
    %v50 = vmul.f32 %v40, 0.9
    %v51 = vsub.f32 %v47, %v49
    %v52 = vsub.f32 %v48, %v50
    %s53 = smul.u32 0, 16
    %v54 = vlaneseq
    %v55 = vshrl.u32 %v54, 7
    %v56 = vadd.s32 %v55, 8
    %v57 = vstv %s53
    %v58 = vadd.s32 %v57, %v55
    %v59 = vadd.s32 %v57, %v56
    %vm60 = vcmp.ne.s32.totalorder %v14, 0
    %vm61 = vcmp.ne.s32.totalorder %v15, 0
    %vm62 = vcmp.lt.s32.totalorder %v58, 16
    %vm63 = vcmp.lt.s32.totalorder %v59, 16
    %vm64 = vmand %vm60, %vm62
    %vm65 = vmand %vm61, %vm63
    %v66 = vsel %vm64, %v51, 0.0
    %v67 = vsel %vm65, %v52, 0.0
    %vm68 = vcmask 7168
    %v69 = vsel %vm68, %v66, 0.0
    %v70 = vsel %vm68, %v67, 0.0
    %v71 = vadd.f32 %v69, %v70
    %72 = vadd.xlane.f32.xlu0 %v71
    %v73 = vpop.xlane.xlu0 %72
    %v74 = vrot.slane %v73, 4
    %v75 = vadd.f32 %v73, %v74
    %v76 = vrot.slane %v75, 2
    %v77 = vadd.f32 %v75, %v76
    %v78 = vrot.slane %v77, 1
    %v79 = vadd.f32 %v77, %v78
    %s80 = vtos %v79
    %v81 = vstv %s80
    %82 = vst [vmem:[#allocation2] sm:$0xff] %v81
    // Predicated region
    $region10: #{tpu_custom_call.1} parent=1 // pred_check
      _
    $region11: #{tpu_custom_call.1} parent=1 // pred_check_branch
      %84 = sbr.rel (0) target = $region13
    $region12: #{tpu_custom_call.1} parent=1 // pred_region
      %s86 = ssub.s32 128, 128
      %87 = vsyncadd [#allocation3], %s86
      %s89 = sshll.u32 [#allocation2], 4
      %s90 = int_to_ptr.vmem [resolvable:$true] %s89
      %92 = dma.vmem_to_hbm [thread:$0]  %s90, 128, %s2, [#allocation3]
    $region13: #{tpu_custom_call.1} parent=1 // pred_fallthru
      _
    // Predicated region
    $region14: #{tpu_custom_call.1} parent=1 // pred_check
      _
    $region15: #{tpu_custom_call.1} parent=1 // pred_check_branch
      %94 = sbr.rel (0) target = $region17
    $region16: #{tpu_custom_call.1} parent=1 // pred_region
      %95 = dma.done [#allocation3], 128
    $region17: #{tpu_custom_call.1} parent=1 // pred_fallthru
      _
    %96 = vsyncpa [#allocation3], 1

</llo_original>
